<compile_context>
chip_gen: v6e
topology: v6e:2x2x1
jax: 0.10.0
libtpu: 0.0.40
codegen_flags: <defaults>
</compile_context>

<pallas_src>
import jax
import jax.numpy as jnp
from jax.experimental import pallas as pl
from jax.experimental.pallas import tpu as pltpu


def _conv1x1_bn_relu_kernel(x_ref, w_ref, scale_ref, bias_ref, o_ref):
    # x_ref:     (1, Cin, T)   -- one batch element, one spatial tile
    # w_ref:     (Cout, Cin)   -- resident across the whole grid
    # scale_ref: (Cout, 1)     -- folded BN scale   (resident)
    # bias_ref:  (Cout, 1)     -- folded BN bias    (resident)
    # o_ref:     (1, Cout, T)
    x = x_ref[0]                                             # (Cin, T)
    acc = jnp.dot(w_ref[...], x,
                  preferred_element_type=jnp.float32)        # (Cout, T) on MXU
    y = acc * scale_ref[...] + bias_ref[...]                 # folded BN (eval)
    o_ref[0] = jnp.maximum(y, 0.0).astype(o_ref.dtype)       # ReLU


def conv1_1_forward(x_nchw, weight, gamma, beta, running_mean, running_var,
                    eps=1e-5, spatial_tile=1024):
    """x_nchw: (N, Cin, H, W); weight: (Cout, Cin, 1, 1) PyTorch convention."""
    N, Cin, H, W = x_nchw.shape
    Cout = weight.shape[0]
    HW = H * W

    # Fold BN (eval mode) into per-channel scale & bias applied after the conv.
    inv_std = 1.0 / jnp.sqrt(running_var.astype(jnp.float32) + eps)
    scale = (gamma * inv_std).reshape(Cout, 1).astype(jnp.float32)
    bias = (beta - running_mean * gamma * inv_std).reshape(Cout, 1).astype(
        jnp.float32)

    # Pure reshapes of contiguous NCHW memory -- no transposes, no HBM copies.
    x = x_nchw.reshape(N, Cin, HW)
    w = weight.reshape(Cout, Cin).astype(jnp.float32)

    # Lane-dense spatial tile: either the full spatial extent (small inputs)
    # or a 128-multiple tile that keeps double-buffered VMEM use modest even
    # on v7x (2 * (T*Cin + T*Cout) * 4B per step).
    T = HW if HW <= spatial_tile else spatial_tile
    grid = (N, pl.cdiv(HW, T))

    flops = 2 * N * HW * Cin * Cout
    bytes_accessed = 4 * (N * Cin * HW + Cin * Cout + N * Cout * HW + 2 * Cout)

    out = pl.pallas_call(
        _conv1x1_bn_relu_kernel,
        out_shape=jax.ShapeDtypeStruct((N, Cout, HW), x_nchw.dtype),
        grid_spec=pltpu.PrefetchScalarGridSpec(
            num_scalar_prefetch=0,
            grid=grid,
            in_specs=[
                pl.BlockSpec((1, Cin, T), lambda n, t: (n, 0, t)),   # activations
                pl.BlockSpec((Cout, Cin), lambda n, t: (0, 0)),      # weight (resident)
                pl.BlockSpec((Cout, 1), lambda n, t: (0, 0)),        # BN scale
                pl.BlockSpec((Cout, 1), lambda n, t: (0, 0)),        # BN bias
            ],
            out_specs=pl.BlockSpec((1, Cout, T), lambda n, t: (n, 0, t)),
        ),
        compiler_params=pltpu.CompilerParams(
            dimension_semantics=("parallel", "parallel")),
        cost_estimate=pl.CostEstimate(
            flops=flops, transcendentals=0, bytes_accessed=bytes_accessed),
    )(x, w, scale, bias)

    # (N, Cout, H*W) -> (N, Cout, H, W): pure reshape, no data movement.
    return out.reshape(N, Cout, H, W)


if __name__ == "__main__":
    key = jax.random.PRNGKey(0)
    k_x, k_w, k_g, k_b, k_m, k_v = jax.random.split(key, 6)

    N, Cin, H, W = 2, 4, 16, 16
    Cout = Cin // 2

    x = jax.random.normal(k_x, (N, Cin, H, W), dtype=jnp.float32)
    weight = jax.random.normal(k_w, (Cout, Cin, 1, 1), dtype=jnp.float32) * 0.1
    gamma = jax.random.normal(k_g, (Cout,), dtype=jnp.float32) * 0.1 + 1.0
    beta = jax.random.normal(k_b, (Cout,), dtype=jnp.float32) * 0.1
    running_mean = jax.random.normal(k_m, (Cout,), dtype=jnp.float32) * 0.1
    running_var = jax.random.uniform(k_v, (Cout,), dtype=jnp.float32,
                                     minval=0.5, maxval=1.5)

    out = conv1_1_forward(x, weight, gamma, beta, running_mean, running_var)
    jax.block_until_ready(out)

    # Pure-JAX reference (same eval-mode BN semantics) for a sanity check.
    ref_conv = jnp.einsum("nchw,oc->nohw", x, weight.reshape(Cout, Cin))
    inv_std = 1.0 / jnp.sqrt(running_var + 1e-5)
    ref = (ref_conv - running_mean[None, :, None, None]) * \
          (gamma * inv_std)[None, :, None, None] + beta[None, :, None, None]
    ref = jnp.maximum(ref, 0.0)
    assert out.shape == (N, Cout, H, W)
    assert jnp.allclose(out, ref, atol=1e-4, rtol=1e-4)

    print("KERNEL_OK")
</pallas_src>

<mosaic_0001>
module attributes {stable_mosaic.version = 11 : i64} {
  func.func @_conv1x1_bn_relu_kernel(%arg0: i32, %arg1: i32, %arg2: memref<1x4x256xf32, #tpu.memory_space<vmem>>, %arg3: memref<2x4xf32, #tpu.memory_space<vmem>>, %arg4: memref<2x1xf32, #tpu.memory_space<vmem>>, %arg5: memref<2x1xf32, #tpu.memory_space<vmem>>, %arg6: memref<1x2x256xf32, #tpu.memory_space<vmem>>) attributes {dimension_semantics = [#tpu.dimension_semantics<parallel>, #tpu.dimension_semantics<parallel>], iteration_bounds = array<i64: 2, 1>, scalar_prefetch = 0 : i64, scratch_operands = 0 : i64, tpu.core_type = #tpu.core_type<tc>, window_params = [{transform_indices = @transform_0, window_bounds = array<i64: 1, 4, 256>}, {pipeline_mode = #tpu.pipeline_mode<synchronous>, transform_indices = @transform_1, window_bounds = array<i64: 2, 4>}, {pipeline_mode = #tpu.pipeline_mode<synchronous>, transform_indices = @transform_2, window_bounds = array<i64: 2, 1>}, {pipeline_mode = #tpu.pipeline_mode<synchronous>, transform_indices = @transform_3, window_bounds = array<i64: 2, 1>}, {transform_indices = @transform_4, window_bounds = array<i64: 1, 2, 256>}]} {
    %c0 = arith.constant 0 : index
    %c0_0 = arith.constant 0 : index
    %c0_1 = arith.constant 0 : index
    %0 = vector.load %arg2[%c0, %c0_0, %c0_1] : memref<1x4x256xf32, #tpu.memory_space<vmem>>, vector<1x4x256xf32>
    %1 = vector.shape_cast %0 : vector<1x4x256xf32> to vector<4x256xf32>
    %c0_2 = arith.constant 0 : index
    %c0_3 = arith.constant 0 : index
    %2 = vector.load %arg3[%c0_2, %c0_3] : memref<2x4xf32, #tpu.memory_space<vmem>>, vector<2x4xf32>
    %cst = arith.constant dense<0.000000e+00> : vector<2x256xf32>
    %3 = tpu.matmul %2, %1, %cst {dimension_numbers = #tpu.dot_dimension_numbers<[1], [0], [0], [1], [0, 0, 1, 1], [], []>} : vector<2x4xf32>, vector<4x256xf32>, vector<2x256xf32> -> vector<2x256xf32>
    %c0_4 = arith.constant 0 : index
    %c0_5 = arith.constant 0 : index
    %4 = vector.load %arg4[%c0_4, %c0_5] : memref<2x1xf32, #tpu.memory_space<vmem>>, vector<2x1xf32>
    %5 = vector.broadcast %4 : vector<2x1xf32> to vector<2x256xf32>
    %6 = arith.mulf %3, %5 : vector<2x256xf32>
    %c0_6 = arith.constant 0 : index
    %c0_7 = arith.constant 0 : index
    %7 = vector.load %arg5[%c0_6, %c0_7] : memref<2x1xf32, #tpu.memory_space<vmem>>, vector<2x1xf32>
    %8 = vector.broadcast %7 : vector<2x1xf32> to vector<2x256xf32>
    %9 = arith.addf %6, %8 : vector<2x256xf32>
    %cst_8 = arith.constant 0.000000e+00 : f32
    %10 = vector.broadcast %cst_8 : f32 to vector<2x256xf32>
    %11 = arith.maximumf %9, %10 : vector<2x256xf32>
    %c0_9 = arith.constant 0 : index
    %c0_10 = arith.constant 0 : index
    %c0_11 = arith.constant 0 : index
    %12 = vector.load %arg6[%c0_9, %c0_10, %c0_11] : memref<1x2x256xf32, #tpu.memory_space<vmem>>, vector<1x2x256xf32>
    %13 = vector.shape_cast %12 : vector<1x2x256xf32> to vector<2x256xf32>
    %14 = vector.shape_cast %11 : vector<2x256xf32> to vector<1x2x256xf32>
    tpu.vector_store %arg6[%c0_9, %c0_10, %c0_11], %14 {strides = array<i32>} : memref<1x2x256xf32, #tpu.memory_space<vmem>>, vector<1x2x256xf32>,
    return
  }
  func.func @transform_0(%arg0: i32, %arg1: i32) -> (i32, i32, i32) {
    %c0_i32 = arith.constant 0 : i32
    %c0_i32_0 = arith.constant 0 : i32
    return %arg0, %c0_i32, %arg1 : i32, i32, i32
  }
  func.func @transform_1(%arg0: i32, %arg1: i32) -> (i32, i32) {
    %c0_i32 = arith.constant 0 : i32
    %c0_i32_0 = arith.constant 0 : i32
    %c0_i32_1 = arith.constant 0 : i32
    return %c0_i32, %c0_i32_0 : i32, i32
  }
  func.func @transform_2(%arg0: i32, %arg1: i32) -> (i32, i32) {
    %c0_i32 = arith.constant 0 : i32
    %c0_i32_0 = arith.constant 0 : i32
    %c0_i32_1 = arith.constant 0 : i32
    return %c0_i32, %c0_i32_0 : i32, i32
  }
  func.func @transform_3(%arg0: i32, %arg1: i32) -> (i32, i32) {
    %c0_i32 = arith.constant 0 : i32
    %c0_i32_0 = arith.constant 0 : i32
    %c0_i32_1 = arith.constant 0 : i32
    return %c0_i32, %c0_i32_0 : i32, i32
  }
  func.func @transform_4(%arg0: i32, %arg1: i32) -> (i32, i32, i32) {
    %c0_i32 = arith.constant 0 : i32
    %c0_i32_0 = arith.constant 0 : i32
    return %arg0, %c0_i32, %arg1 : i32, i32, i32
  }
}

</mosaic_0001>

<llo_original>
// kernel: tpu_custom_call.1
$region0: #{tpu_custom_call.1}
  #allocation0 [shape = 'u32[]', space=smem, size = 0x4, offset = 0x4, fixed_abs, tag = 'smem constant byte address 0x4 - core index']
  #allocation1 [shape = 'u32[144,128]{1,0:T(1,128)}', space=vmem, size = 0x12000, scoped, tag = 'internal scratch']
  %s0 = inlined_call_operand.hbm [shape: f32[2,4,256], index: 0, kind: input, shape index: {}]
  %s1 = inlined_call_operand.vmem [shape: f32[2,4], index: 1, kind: input, shape index: {}]
  %s2 = inlined_call_operand.vmem [shape: f32[2,1], index: 2, kind: input, shape index: {}]
  %s3 = inlined_call_operand.vmem [shape: f32[2,1], index: 3, kind: input, shape index: {}]
  %s4 = inlined_call_operand.hbm [shape: f32[2,2,256], index: 4, kind: output, shape index: {}]
  %s5 = sld [smem:[#allocation0]]
  $region53: #{tpu_custom_call.1} parent=0
    _
  %s7 = ssub.s32 1, %s5
  %s8 = scalar_select 0, %s7, %s5
  $region1: #{tpu_custom_call.1} parent=0
    #allocation2 [shape = 'u8[8192]{0}', space=vmem, size = 0x2000, scoped, tag = 'input window, operand 0']
    #allocation3 [shape = 's32[2]{0}', space=sflag, size = 0x8, scoped, tag = 'scoped memory for tpu_custom_call.1']
    #allocation4 [shape = 's32[2]{0}', space=sflag, size = 0x8, scoped, tag = 'scoped memory for tpu_custom_call.1']
    #allocation5 [shape = 'u8[4096]{0}', space=vmem, size = 0x1000, scoped, tag = 'output window, operand 0']
    %9 = vsyncpa [#allocation3], 0
    %s10 = scalar_lea.sflag [#allocation3], 1
    %11 = vsyncpa %s10, 0
    %12 = vsyncpa [#allocation4], 0
    %s13 = scalar_lea.sflag [#allocation4], 1
    %14 = vsyncpa %s13, 0
    loop: start=0, step=1, limit=4
    $region2: #{tpu_custom_call.1} parent=1 // loop_pre_header
      _
    $region3: #{tpu_custom_call.1} parent=1 // loop_header
      %s16 = sphi 0, %s20
      %p17 = scmp.ge.s32.totalorder %s16, 4
      %s23 = sphi 0, %s35
      %s24 = sphi 0, %s31
      %s25 = sphi 0, %s23
      %s26 = sphi 0, %s24
      %s27 = sphi 0, %s25
      %s28 = sphi 0, %s26
      %s40 = sphi 0, %s42
      %s43 = sphi 0, %s40
      %s44 = sphi 0, %s43
      %s60 = sphi 0, %s44
      %s64 = sphi 0, %s64
      %s66 = sphi 0, %s64
      %s67 = sphi 0, %s66
      %s81 = sphi 0, %s67
      %s85 = sphi 0, %s85
      %s87 = sphi 0, %s85
      %s88 = sphi 0, %s87
      %s102 = sphi 0, %s88
      %s106 = sphi 0, %s106
      %s108 = sphi 0, %s106
      %s109 = sphi 0, %s108
      %s123 = sphi 0, %s109
      %s131 = sphi 0, %s133
      %s134 = sphi 0, %s131
      %s135 = sphi 0, %s134
      %s151 = sphi 0, %s135
    $region4: #{tpu_custom_call.1} parent=1 // loop_header_branch
      %19 = sbr.rel (%p17) target = $region8
    $region5: #{tpu_custom_call.1} parent=1 // loop_body
      %s21 = ssub.s32 %s16, 1
      %s22 = ssub.s32 %s16, 2
      %s29 = sadd.s32 1, %s24
      %p30 = scmp.ge.s32.totalorder %s29, 1
      %s31 = scalar_select %p30, 0, %s29
      %s32 = sadd.s32 1, %s23
      %s33 = scalar_select %p30, %s32, %s23
      %p34 = scmp.ge.s32.totalorder %s33, 2
      %s35 = scalar_select %p34, 0, %s33
      %s36 = ssub.s32 %s23, %s35
      %s37 = ssub.s32 %s24, %s31
      %s38 = sor.u32 %s36, %s37
      %p39 = scmp.eq.s32.totalorder %s38, 0
      %s41 = sadd.s32 %s40, 1
      %s42 = scalar_select %p39, %s40, %s41
      %p45 = pneg %p39
      %p46 = scmp.eq.s32.totalorder %s16, 1
      %p47 = por %p45, %p46
      %p48 = scmp.ne.s32.totalorder %s40, %s43
      %p49 = scmp.eq.s32.totalorder %s16, 0
      %p50 = por %p48, %p49
      %p51 = scmp.ne.s32.totalorder %s40, %s43
      %p52 = scmp.eq.s32.totalorder %s21, 1
      %p53 = por %p51, %p52
      %p54 = scmp.ne.s32.totalorder %s43, %s44
      %p55 = scmp.eq.s32.totalorder %s21, 0
      %p56 = por %p54, %p55
      %p57 = scmp.ne.s32.totalorder %s43, %s44
      %p58 = scmp.eq.s32.totalorder %s22, 1
      %p59 = por %p57, %p58
      %p61 = scmp.ne.s32.totalorder %s44, %s60
      %p62 = scmp.eq.s32.totalorder %s22, 0
      %p63 = por %p61, %p62
      %s65 = sadd.s32 %s64, 1
      %p68 = scmp.eq.s32.totalorder %s16, 1
      %p69 = scmp.ne.s32.totalorder %s64, %s66
      %p70 = scmp.eq.s32.totalorder %s16, 0
      %p71 = por %p69, %p70
      %p72 = scmp.ne.s32.totalorder %s64, %s66
      %p73 = scmp.eq.s32.totalorder %s21, 1
      %p74 = por %p72, %p73
      %p75 = scmp.ne.s32.totalorder %s66, %s67
      %p76 = scmp.eq.s32.totalorder %s21, 0
      %p77 = por %p75, %p76
      %p78 = scmp.ne.s32.totalorder %s66, %s67
      %p79 = scmp.eq.s32.totalorder %s22, 1
      %p80 = por %p78, %p79
      %p82 = scmp.ne.s32.totalorder %s67, %s81
      %p83 = scmp.eq.s32.totalorder %s22, 0
      %p84 = por %p82, %p83
      %s86 = sadd.s32 %s85, 1
      %p89 = scmp.eq.s32.totalorder %s16, 1
      %p90 = scmp.ne.s32.totalorder %s85, %s87
      %p91 = scmp.eq.s32.totalorder %s16, 0
      %p92 = por %p90, %p91
      %p93 = scmp.ne.s32.totalorder %s85, %s87
      %p94 = scmp.eq.s32.totalorder %s21, 1
      %p95 = por %p93, %p94
      %p96 = scmp.ne.s32.totalorder %s87, %s88
      %p97 = scmp.eq.s32.totalorder %s21, 0
      %p98 = por %p96, %p97
      %p99 = scmp.ne.s32.totalorder %s87, %s88
      %p100 = scmp.eq.s32.totalorder %s22, 1
      %p101 = por %p99, %p100
      %p103 = scmp.ne.s32.totalorder %s88, %s102
      %p104 = scmp.eq.s32.totalorder %s22, 0
      %p105 = por %p103, %p104
      %s107 = sadd.s32 %s106, 1
      %p110 = scmp.eq.s32.totalorder %s16, 1
      %p111 = scmp.ne.s32.totalorder %s106, %s108
      %p112 = scmp.eq.s32.totalorder %s16, 0
      %p113 = por %p111, %p112
      %p114 = scmp.ne.s32.totalorder %s106, %s108
      %p115 = scmp.eq.s32.totalorder %s21, 1
      %p116 = por %p114, %p115
      %p117 = scmp.ne.s32.totalorder %s108, %s109
      %p118 = scmp.eq.s32.totalorder %s21, 0
      %p119 = por %p117, %p118
      %p120 = scmp.ne.s32.totalorder %s108, %s109
      %p121 = scmp.eq.s32.totalorder %s22, 1
      %p122 = por %p120, %p121
      %p124 = scmp.ne.s32.totalorder %s109, %s123
      %p125 = scmp.eq.s32.totalorder %s22, 0
      %p126 = por %p124, %p125
      %s127 = ssub.s32 %s23, %s35
      %s128 = ssub.s32 %s24, %s31
      %s129 = sor.u32 %s127, %s128
      %p130 = scmp.eq.s32.totalorder %s129, 0
      %s132 = sadd.s32 %s131, 1
      %s133 = scalar_select %p130, %s131, %s132
      %p136 = pneg %p130
      %p137 = scmp.eq.s32.totalorder %s16, 1
      %p138 = por %p136, %p137
      %p139 = scmp.ne.s32.totalorder %s131, %s134
      %p140 = scmp.eq.s32.totalorder %s16, 0
      %p141 = por %p139, %p140
      %p142 = scmp.ne.s32.totalorder %s131, %s134
      %p143 = scmp.eq.s32.totalorder %s21, 1
      %p144 = por %p142, %p143
      %p145 = scmp.ne.s32.totalorder %s134, %s135
      %p146 = scmp.eq.s32.totalorder %s21, 0
      %p147 = por %p145, %p146
      %p148 = scmp.ne.s32.totalorder %s134, %s135
      %p149 = scmp.eq.s32.totalorder %s22, 1
      %p150 = por %p148, %p149
      %p152 = scmp.ne.s32.totalorder %s135, %s151
      %p153 = scmp.eq.s32.totalorder %s22, 0
      %p154 = por %p152, %p153
      %p155 = scmp.le.s32.totalorder 1, %s16
      %p156 = scmp.lt.s32.totalorder %s16, 3
      %p157 = pnand %p155, %p156
      %p158 = pneg %p157
      // Predicated region
      $region9: #{tpu_custom_call.1} parent=5 // pred_check
        _
      $region10: #{tpu_custom_call.1} parent=5 // pred_check_branch
        %160 = sbr.rel (%p157) target = $region12
      $region11: #{tpu_custom_call.1} parent=5 // pred_region
        %s161 = ssub.s32 %s16, 1
        // Predicated region
        $region13: #{tpu_custom_call.1} parent=11 // pred_check
          %p162 = pneg %p77
        $region14: #{tpu_custom_call.1} parent=11 // pred_check_branch
          %164 = sbr.rel (%p162) target = $region16
        $region15: #{tpu_custom_call.1} parent=11 // pred_region
          _
        $region16: #{tpu_custom_call.1} parent=11 // pred_fallthru
          _
        // Predicated region
        $region17: #{tpu_custom_call.1} parent=11 // pred_check
          %p165 = pneg %p98
        $region18: #{tpu_custom_call.1} parent=11 // pred_check_branch
          %167 = sbr.rel (%p165) target = $region20
        $region19: #{tpu_custom_call.1} parent=11 // pred_region
          _
        $region20: #{tpu_custom_call.1} parent=11 // pred_fallthru
          _
        // Predicated region
        $region21: #{tpu_custom_call.1} parent=11 // pred_check
          %p168 = pneg %p119
        $region22: #{tpu_custom_call.1} parent=11 // pred_check_branch
          %170 = sbr.rel (%p168) target = $region24
        $region23: #{tpu_custom_call.1} parent=11 // pred_region
          _
        $region24: #{tpu_custom_call.1} parent=11 // pred_fallthru
          _
      $region12: #{tpu_custom_call.1} parent=5 // pred_fallthru
        _
      %p171 = scmp.lt.s32.totalorder %s16, 2
      // Predicated region
      $region25: #{tpu_custom_call.1} parent=5 // pred_check
        %p172 = pneg %p171
      $region26: #{tpu_custom_call.1} parent=5 // pred_check_branch
        %174 = sbr.rel (%p172) target = $region28
      $region27: #{tpu_custom_call.1} parent=5 // pred_region
        // Predicated region
        $region29: #{tpu_custom_call.1} parent=27 // pred_check
          %p175 = pneg %p50
        $region30: #{tpu_custom_call.1} parent=27 // pred_check_branch
          %177 = sbr.rel (%p175) target = $region32
        $region31: #{tpu_custom_call.1} parent=27 // pred_region
          %s178 = sand.u32 %s40, 1
          %s179 = scalar_lea.sflag [#allocation3], %s178
          %s180 = sand.u32 %s40, 1
          %s181 = smul.addr %s180, 8
          %s182 = scalar_lea.vmem [#allocation2], %s181
          %s183 = smul.u32 2, %s24
          %s185 = ssub.s32 128, 128
          %186 = vsyncadd %s179, %s185
          %s187 = smul.addr %s23, 2
          %s188 = sadd.s32 %s183, %s187
          %s189 = smul.addr %s188, 64
          %s190 = scalar_lea.hbm %s0, %s189
          %s192 = sshll.u32 %s182, 4
          %s193 = int_to_ptr.vmem [resolvable:$true] %s192
          %195 = dma.hbm_to_vmem [thread:$0]  %s190, 128, %s193, %s179
        $region32: #{tpu_custom_call.1} parent=27 // pred_fallthru
          _
      $region28: #{tpu_custom_call.1} parent=5 // pred_fallthru
        _
      %p196 = scmp.le.s32.totalorder 1, %s16
      %p197 = scmp.lt.s32.totalorder %s16, 3
      %p198 = pnand %p196, %p197
      %p199 = pneg %p198
      // Predicated region
      $region33: #{tpu_custom_call.1} parent=5 // pred_check
        _
      $region34: #{tpu_custom_call.1} parent=5 // pred_check_branch
        %201 = sbr.rel (%p198) target = $region36
      $region35: #{tpu_custom_call.1} parent=5 // pred_region
        %s202 = ssub.s32 %s16, 1
        %s203 = sand.u32 %s43, 1
        %s204 = scalar_lea.sflag [#allocation3], %s203
        %s205 = sand.u32 %s43, 1
        %s206 = smul.addr %s205, 8
        %s207 = scalar_lea.vmem [#allocation2], %s206
        // Predicated region
        $region37: #{tpu_custom_call.1} parent=35 // pred_check
          %p208 = pneg %p56
        $region38: #{tpu_custom_call.1} parent=35 // pred_check_branch
          %210 = sbr.rel (%p208) target = $region40
        $region39: #{tpu_custom_call.1} parent=35 // pred_region
          %211 = dma.done %s204, 128
        $region40: #{tpu_custom_call.1} parent=35 // pred_fallthru
          _
        %s212 = sand.u32 %s43, 1
        %s213 = scalar_lea.sflag [#allocation3], %s212
        %s214 = sand.u32 %s43, 1
        %s215 = smul.addr %s214, 8
        %s216 = scalar_lea.vmem [#allocation2], %s215
        %p217 = pneg %p56
        %p218 = pneg %p53
        %p219 = pneg %p77
        %p220 = pneg %p74
        %p221 = pneg %p98
        %p222 = pneg %p95
        %p223 = pneg %p119
        %p224 = pneg %p116
        %p225 = pneg %p147
        %p226 = pneg %p144
        %s227 = sand.u32 %s134, 1
        %s228 = scalar_lea.sflag [#allocation4], %s227
        %s229 = sand.u32 %s134, 1
        %s230 = smul.addr %s229, 4
        %s231 = scalar_lea.vmem [#allocation5], %s230
        %s232 = smul.u32 2, %s26
        %s233 = smul.u32 2, %s26
        %v234 = vld [vmem:[%s207] sm:$0xff]
        %v235 = vld [vmem:[%s1] sm:$0x3]
        %v237 = vcombine.high %v234, %v234
        %vm238 = vcmask 31744
        %v240 = vsel %vm238, %v235, 0
        %vm242 = vcmask 1043456
        %v243 = vsel %vm242, %v234, 0
        %v245 = vsel %vm242, %v237, 0
        %247 = vmatprep.subr.mxu0 0.0
        %248 = vmatpush1.msra.mxu0 0.0
        %249 = vmatprep.subr.mxu0 0.0
        %250 = vmatpush1.msra.mxu0 0.0
        %251 = vmatprep.subr.mxu0 0.0
        %252 = vmatpush1.msra.mxu0 0.0
        %253 = vmatprep.subr.mxu0 0.0
        %254 = vmatpush1.msra.mxu0 0.0
        %255 = vmatprep.subr.mxu0 0.0
        %256 = vmatpush1.msra.mxu0 0.0
        %257 = vmatprep.subr.mxu0 0.0
        %258 = vmatpush1.msra.mxu0 0.0
        %259 = vmatprep.subr.mxu0 0.0
        %260 = vmatpush1.msra.mxu0 0.0
        %261 = vmatprep.subr.mxu0 0.0
        %262 = vmatpush1.msra.mxu0 0.0
        %263 = vmatprep.subr.mxu0 0.0
        %264 = vmatpush1.msra.mxu0 0.0
        %265 = vmatprep.subr.mxu0 0.0
        %266 = vmatpush1.msra.mxu0 0.0
        %267 = vmatprep.subr.mxu0 0.0
        %268 = vmatpush1.msra.mxu0 0.0
        %269 = vmatprep.subr.mxu0 0.0
        %270 = vmatpush1.msra.mxu0 0.0
        %271 = vmatprep.subr.mxu0 0.0
        %272 = vmatpush1.msra.mxu0 0.0
        %273 = vmatprep.subr.mxu0 0.0
        %274 = vmatpush1.msra.mxu0 0.0
        %275 = vmatprep.subr.mxu0 0.0
        %276 = vmatpush1.msra.mxu0 0.0
        %277 = vmatprep.subr.mxu0 %v245
        %278 = vmatpush1.msra.mxu0 %v243
        %279 = vmatprep.subr.mxu0 0.0
        %280 = vmatpush2.msra.mxu0 0.0
        %281 = vmatprep.subr.mxu0 0.0
        %282 = vmatpush2.msra.mxu0 0.0
        %283 = vmatprep.subr.mxu0 0.0
        %284 = vmatpush2.msra.mxu0 0.0
        %285 = vmatprep.subr.mxu0 0.0
        %286 = vmatpush2.msra.mxu0 0.0
        %287 = vmatprep.subr.mxu0 0.0
        %288 = vmatpush2.msra.mxu0 0.0
        %289 = vmatprep.subr.mxu0 0.0
        %290 = vmatpush2.msra.mxu0 0.0
        %291 = vmatprep.subr.mxu0 0.0
        %292 = vmatpush2.msra.mxu0 0.0
        %293 = vmatprep.subr.mxu0 0.0
        %294 = vmatpush2.msra.mxu0 0.0
        %295 = vmatprep.subr.mxu0 0.0
        %296 = vmatpush2.msra.mxu0 0.0
        %297 = vmatprep.subr.mxu0 0.0
        %298 = vmatpush2.msra.mxu0 0.0
        %299 = vmatprep.subr.mxu0 0.0
        %300 = vmatpush2.msra.mxu0 0.0
        %301 = vmatprep.subr.mxu0 0.0
        %302 = vmatpush2.msra.mxu0 0.0
        %303 = vmatprep.subr.mxu0 0.0
        %304 = vmatpush2.msra.mxu0 0.0
        %305 = vmatprep.subr.mxu0 0.0
        %306 = vmatpush2.msra.mxu0 0.0
        %307 = vmatprep.subr.mxu0 0.0
        %308 = vmatpush2.msra.mxu0 0.0
        %309 = vmatprep.subr.mxu0 0.0
        %310 = vmatpush2.msra.mxu0 0.0
        %311 = vmatprep.mubr.f32.mxu0 0.0
        %312 = vmatmul.mubr.f32.gmra.mxu0 %v240
        %v313 = vpop.f32.mrf.mxu0
        %v314 = vadd.f32 0.0, %v313
        %v315 = vpop.f32.mrf.mxu0
        %v316 = vadd.f32 0.0, %v315
        %317 = vdwg.mxu0
        %v318 = vld [vmem:[%s2] sm:$0x3]
        %320 = vset.pattern.permute.xlu0 0
        %321 = vperm.xlu0 %320, %v318
        %v322 = vpop.permute.xlu0 %321
        %v324 = vmul.f32 %v314, %v322
        %v325 = vmul.f32 %v316, %v322
        %v326 = vld [vmem:[%s3] sm:$0x3]
        %328 = vset.pattern.permute.xlu0 0
        %329 = vperm.xlu0 %328, %v326
        %v330 = vpop.permute.xlu0 %329
        %v332 = vadd.f32 %v324, %v330
        %v333 = vadd.f32 %v325, %v330
        %v334 = vmax.f32 %v332, 0.0
        %v335 = vmax.f32 %v333, 0.0
        %v338 = vcombine.low %v334, %v335
        %v340 = vunpack.c.l.s4 1983009808
        %v341 = vunpack.c.0.s8 %v340
        %v342 = vlaneseq
        %v343 = vshrl.u32 %v342, 7
        %v344 = vsub.s32 %v341, %v343
        %v345 = vrot.slane %v338, %v344
        %347 = vst [vmem:[%s231] sm:$0xf] %v345
        %s348 = sand.u32 %s134, 1
        %s349 = scalar_lea.sflag [#allocation4], %s348
        %s350 = sand.u32 %s134, 1
        %s351 = smul.addr %s350, 4
        %s352 = scalar_lea.vmem [#allocation5], %s351
        // Predicated region
        $region41: #{tpu_custom_call.1} parent=35 // pred_check
          %p353 = pneg %p144
        $region42: #{tpu_custom_call.1} parent=35 // pred_check_branch
          %355 = sbr.rel (%p353) target = $region44
        $region43: #{tpu_custom_call.1} parent=35 // pred_region
          %s356 = smul.u32 2, %s26
          %s358 = ssub.s32 64, 64
          %359 = vsyncadd %s349, %s358
          %s360 = smul.addr %s25, 2
          %s361 = sadd.s32 %s356, %s360
          %s362 = smul.addr %s361, 32
          %s363 = scalar_lea.hbm %s4, %s362
          %s365 = sshll.u32 %s352, 4
          %s366 = int_to_ptr.vmem [resolvable:$true] %s365
          %368 = dma.vmem_to_hbm [thread:$0]  %s366, 64, %s363, %s349
        $region44: #{tpu_custom_call.1} parent=35 // pred_fallthru
          _
      $region36: #{tpu_custom_call.1} parent=5 // pred_fallthru
        _
      %p369 = scmp.le.s32.totalorder 2, %s16
      // Predicated region
      $region45: #{tpu_custom_call.1} parent=5 // pred_check
        %p370 = pneg %p369
      $region46: #{tpu_custom_call.1} parent=5 // pred_check_branch
        %372 = sbr.rel (%p370) target = $region48
      $region47: #{tpu_custom_call.1} parent=5 // pred_region
        %s373 = ssub.s32 %s16, 2
        // Predicated region
        $region49: #{tpu_custom_call.1} parent=47 // pred_check
          %p374 = pneg %p150
        $region50: #{tpu_custom_call.1} parent=47 // pred_check_branch
          %376 = sbr.rel (%p374) target = $region52
        $region51: #{tpu_custom_call.1} parent=47 // pred_region
          %s377 = sand.u32 %s135, 1
          %s378 = scalar_lea.sflag [#allocation4], %s377
          %s379 = sand.u32 %s135, 1
          %s380 = smul.addr %s379, 4
          %s381 = scalar_lea.vmem [#allocation5], %s380
          %382 = dma.done %s378, 64
        $region52: #{tpu_custom_call.1} parent=47 // pred_fallthru
          _
      $region48: #{tpu_custom_call.1} parent=5 // pred_fallthru
        _
    $region6: #{tpu_custom_call.1} parent=1 // loop_footer
      %s20 = sadd.s32 1, %s16
    $region7: #{tpu_custom_call.1} parent=1 // loop_footer_branch
      %15 = sbr.rel target = $region3
    $region8: #{tpu_custom_call.1} parent=1 // loop_exit
      _
    %383 = vsyncpa [#allocation3], 1
    %s384 = scalar_lea.sflag [#allocation3], 1
    %385 = vsyncpa %s384, 1
    %386 = vsyncpa [#allocation4], 1
    %s387 = scalar_lea.sflag [#allocation4], 1
    %388 = vsyncpa %s387, 1

</llo_original>
